<compile_context>
chip_gen: v7x
topology: tpu7x:2x2x1
jax: 0.10.0
libtpu: 0.0.40
codegen_flags: <defaults>
</compile_context>

<pallas_src>
import jax
import jax.numpy as jnp
from jax.experimental import pallas as pl
from jax.experimental.pallas import tpu as pltpu

HIDDEN = 256  # nn.Linear hidden_size in the PyTorch module


def _round_up(n, m):
    return ((n + m - 1) // m) * m


def _critic_kernel(x_ref, w1_ref, b1_ref, w2_ref, b2_ref, w3_ref, b3_ref, o_ref):
    # Layer 1: Linear(S -> 256) + ReLU.  bf16 MXU operands, f32 accumulation,
    # f32 VPU epilogue.
    x = x_ref[...].astype(jnp.bfloat16)
    h1 = jnp.dot(x, w1_ref[...], preferred_element_type=jnp.float32)
    h1 = jnp.maximum(h1 + b1_ref[...], 0.0)
    # Layer 2: Linear(256 -> 256) + ReLU.
    h2 = jnp.dot(h1.astype(jnp.bfloat16), w2_ref[...],
                 preferred_element_type=jnp.float32)
    h2 = jnp.maximum(h2 + b2_ref[...], 0.0)
    # Layer 3: Linear(256 -> 1).  w3 is a lane-dense f32 [1, 256] row: VPU
    # multiply + lane reduce on the XLU instead of an N=1 (lane padded) MXU
    # matmul.  b3 is a scalar read from SMEM.
    v = jnp.sum(h2 * w3_ref[...], axis=-1) + b3_ref[0, 0]      # (TILE_B,) f32
    # Lane-dense store: pack the per-row scalars as (1, TILE_B//128, 128) so
    # the output block is written with full-width stores (one relayout, XLU
    # has slack here).
    o_ref[...] = v.reshape(o_ref.shape).astype(o_ref.dtype)


def _choose_tile_b(B, tile_b):
    # Output packing needs TILE_B to be a multiple of 128 (128 lanes per row
    # of the lane-dense output block); this also satisfies the sublane rule.
    tile_b = max(128, _round_up(tile_b, 128))
    # Cap so f32 h1/h2/temporaries (~3 * TILE_B KiB) + double-buffered x stay
    # comfortably inside v7x's 32 MiB scoped VMEM default.
    tile_b = min(tile_b, 4096)
    b_pad = _round_up(B, 128)
    if b_pad >= 256:
        # At least two grid tiles so both v7x TensorCores get work via
        # dimension_semantics=("parallel",).  Harmless on v5e/v6e (1 TC).
        tile_b = min(tile_b, _round_up(b_pad // 2, 128))
    else:
        tile_b = min(tile_b, b_pad)
    return tile_b


def critic_net_forward(x, params, *, tile_b=2048):
    """Pallas implementation of CriticNet._eval.

    x: [B, state_feature_size] float32
    params: dict with w1 [S,256] bf16, b1 [1,256] f32, w2 [256,256] bf16,
            b2 [1,256] f32, w3 [1,256] f32 (row layout), b3 [1,1] f32
    returns: [B, 1] float32
    """
    B, S = x.shape
    TILE_B = _choose_tile_b(B, tile_b)
    Bp = _round_up(B, TILE_B)
    if Bp != B:
        x = jnp.pad(x, ((0, Bp - B), (0, 0)))
    n_tiles = Bp // TILE_B
    rows = TILE_B // 128

    grid_spec = pltpu.PrefetchScalarGridSpec(
        num_scalar_prefetch=0,
        grid=(n_tiles,),
        in_specs=[
            # x: tiled on batch, streamed / double-buffered per grid step.
            pl.BlockSpec((TILE_B, S), lambda i: (i, 0)),
            # Weights & biases: constant block index -> resident in VMEM.
            pl.BlockSpec((S, HIDDEN), lambda i: (0, 0)),        # w1 (bf16)
            pl.BlockSpec((1, HIDDEN), lambda i: (0, 0)),        # b1 (f32)
            pl.BlockSpec((HIDDEN, HIDDEN), lambda i: (0, 0)),   # w2 (bf16)
            pl.BlockSpec((1, HIDDEN), lambda i: (0, 0)),        # b2 (f32)
            pl.BlockSpec((1, HIDDEN), lambda i: (0, 0)),        # w3 row (f32)
            # b3: single scalar, keep it in SMEM (scalar slot has slack).
            pl.BlockSpec(memory_space=pltpu.MemorySpace.SMEM),
        ],
        # Lane-dense output: one (1, rows, 128) block per batch tile; the
        # trailing two block dims equal the full array dims, so the (8,128)
        # constraint is satisfied for any tile size.
        out_specs=pl.BlockSpec((1, rows, 128), lambda i: (i, 0, 0)),
    )

    out = pl.pallas_call(
        _critic_kernel,
        out_shape=jax.ShapeDtypeStruct((n_tiles, rows, 128), jnp.float32),
        grid_spec=grid_spec,
        compiler_params=pltpu.CompilerParams(
            dimension_semantics=("parallel",),  # megacore: shard batch tiles
        ),
    )(x, params["w1"], params["b1"], params["w2"], params["b2"],
      params["w3"], params["b3"])

    # (n_tiles, rows, 128) row-major flatten == padded batch order.
    return out.reshape(Bp, 1)[:B]


def init_params(key, state_feature_size):
    """Deterministic synthetic init (PyTorch-style uniform fan-in bounds)."""
    ks = jax.random.split(key, 6)

    def lin(kw, kb, fan_in, fan_out):
        bound = 1.0 / jnp.sqrt(fan_in)
        w = jax.random.uniform(kw, (fan_in, fan_out), jnp.float32, -bound, bound)
        b = jax.random.uniform(kb, (1, fan_out), jnp.float32, -bound, bound)
        return w, b

    w1, b1 = lin(ks[0], ks[1], state_feature_size, HIDDEN)
    w2, b2 = lin(ks[2], ks[3], HIDDEN, HIDDEN)
    w3, b3 = lin(ks[4], ks[5], HIDDEN, 1)
    return dict(
        w1=w1.astype(jnp.bfloat16),   # MXU operand -> bf16
        b1=b1,                        # f32 VPU epilogue
        w2=w2.astype(jnp.bfloat16),   # MXU operand -> bf16
        b2=b2,
        w3=w3.T,                      # lane-dense f32 [1, 256] row
        b3=b3,                        # (1, 1) f32 scalar (lives in SMEM)
    )


def critic_net_ref(x, p):
    """Reference with the same bf16-matmul / f32-epilogue precision choices."""
    h1 = jnp.maximum(
        jnp.dot(x.astype(jnp.bfloat16), p["w1"],
                preferred_element_type=jnp.float32) + p["b1"], 0.0)
    h2 = jnp.maximum(
        jnp.dot(h1.astype(jnp.bfloat16), p["w2"],
                preferred_element_type=jnp.float32) + p["b2"], 0.0)
    return jnp.sum(h2 * p["w3"], axis=-1, keepdims=True) + p["b3"]


if __name__ == "__main__":
    key = jax.random.PRNGKey(0)
    k_x, k_p = jax.random.split(key)

    batch = 8
    state_feature_size = 32

    x = jax.random.normal(k_x, (batch, state_feature_size), jnp.float32)
    params = init_params(k_p, state_feature_size)

    out = jax.block_until_ready(critic_net_forward(x, params))
    ref = critic_net_ref(x, params)
    assert out.shape == (batch, 1)
    assert jnp.allclose(out, ref, atol=1e-3, rtol=1e-3), \
        float(jnp.max(jnp.abs(out - ref)))

    # Exercise the multi-tile / padded / megacore path (B not a tile multiple).
    x2 = jax.random.normal(k_x, (300, state_feature_size), jnp.float32)
    out2 = jax.block_until_ready(critic_net_forward(x2, params, tile_b=128))
    assert out2.shape == (300, 1)
    assert jnp.allclose(out2, critic_net_ref(x2, params), atol=1e-3, rtol=1e-3)

    print("KERNEL_OK")
</pallas_src>

<mosaic_0001>
module attributes {stable_mosaic.version = 11 : i64} {
  func.func @_critic_kernel(%arg0: i32, %arg1: memref<128x32xf32, #tpu.memory_space<vmem>>, %arg2: memref<32x256xbf16, #tpu.memory_space<vmem>>, %arg3: memref<1x256xf32, #tpu.memory_space<vmem>>, %arg4: memref<256x256xbf16, #tpu.memory_space<vmem>>, %arg5: memref<1x256xf32, #tpu.memory_space<vmem>>, %arg6: memref<1x256xf32, #tpu.memory_space<vmem>>, %arg7: memref<1x1xf32, #tpu.memory_space<smem>>, %arg8: memref<1x1x128xf32, #tpu.memory_space<vmem>>) attributes {dimension_semantics = [#tpu.dimension_semantics<parallel>], iteration_bounds = array<i64: 1>, scalar_prefetch = 0 : i64, scratch_operands = 0 : i64, tpu.core_type = #tpu.core_type<tc>, window_params = [{transform_indices = @transform_0, window_bounds = array<i64: 128, 32>}, {pipeline_mode = #tpu.pipeline_mode<synchronous>, transform_indices = @transform_1, window_bounds = array<i64: 32, 256>}, {pipeline_mode = #tpu.pipeline_mode<synchronous>, transform_indices = @transform_2, window_bounds = array<i64: 1, 256>}, {pipeline_mode = #tpu.pipeline_mode<synchronous>, transform_indices = @transform_3, window_bounds = array<i64: 256, 256>}, {pipeline_mode = #tpu.pipeline_mode<synchronous>, transform_indices = @transform_4, window_bounds = array<i64: 1, 256>}, {pipeline_mode = #tpu.pipeline_mode<synchronous>, transform_indices = @transform_5, window_bounds = array<i64: 1, 256>}, {transform_indices = @transform_6, window_bounds = array<i64: 1, 1>}, {transform_indices = @transform_7, window_bounds = array<i64: 1, 1, 128>}]} {
    %c0 = arith.constant 0 : index
    %c0_0 = arith.constant 0 : index
    %0 = vector.load %arg1[%c0, %c0_0] : memref<128x32xf32, #tpu.memory_space<vmem>>, vector<128x32xf32>
    %1 = arith.truncf %0 : vector<128x32xf32> to vector<128x32xbf16>
    %c0_1 = arith.constant 0 : index
    %c0_2 = arith.constant 0 : index
    %2 = vector.load %arg2[%c0_1, %c0_2] : memref<32x256xbf16, #tpu.memory_space<vmem>>, vector<32x256xbf16>
    %cst = arith.constant dense<0.000000e+00> : vector<128x256xf32>
    %3 = tpu.matmul %1, %2, %cst {dimension_numbers = #tpu.dot_dimension_numbers<[1], [0], [0], [1], [0, 0, 1, 1], [], []>} : vector<128x32xbf16>, vector<32x256xbf16>, vector<128x256xf32> -> vector<128x256xf32>
    %c0_3 = arith.constant 0 : index
    %c0_4 = arith.constant 0 : index
    %4 = vector.load %arg3[%c0_3, %c0_4] : memref<1x256xf32, #tpu.memory_space<vmem>>, vector<1x256xf32>
    %5 = vector.broadcast %4 : vector<1x256xf32> to vector<128x256xf32>
    %6 = arith.addf %3, %5 : vector<128x256xf32>
    %cst_5 = arith.constant 0.000000e+00 : f32
    %7 = vector.broadcast %cst_5 : f32 to vector<128x256xf32>
    %8 = arith.maximumf %6, %7 : vector<128x256xf32>
    %9 = arith.truncf %8 : vector<128x256xf32> to vector<128x256xbf16>
    %c0_6 = arith.constant 0 : index
    %c0_7 = arith.constant 0 : index
    %10 = vector.load %arg4[%c0_6, %c0_7] : memref<256x256xbf16, #tpu.memory_space<vmem>>, vector<256x256xbf16>
    %cst_8 = arith.constant dense<0.000000e+00> : vector<128x256xf32>
    %11 = tpu.matmul %9, %10, %cst_8 {dimension_numbers = #tpu.dot_dimension_numbers<[1], [0], [0], [1], [0, 0, 1, 1], [], []>} : vector<128x256xbf16>, vector<256x256xbf16>, vector<128x256xf32> -> vector<128x256xf32>
    %c0_9 = arith.constant 0 : index
    %c0_10 = arith.constant 0 : index
    %12 = vector.load %arg5[%c0_9, %c0_10] : memref<1x256xf32, #tpu.memory_space<vmem>>, vector<1x256xf32>
    %13 = vector.broadcast %12 : vector<1x256xf32> to vector<128x256xf32>
    %14 = arith.addf %11, %13 : vector<128x256xf32>
    %cst_11 = arith.constant 0.000000e+00 : f32
    %15 = vector.broadcast %cst_11 : f32 to vector<128x256xf32>
    %16 = arith.maximumf %14, %15 : vector<128x256xf32>
    %c0_12 = arith.constant 0 : index
    %c0_13 = arith.constant 0 : index
    %17 = vector.load %arg6[%c0_12, %c0_13] : memref<1x256xf32, #tpu.memory_space<vmem>>, vector<1x256xf32>
    %18 = vector.broadcast %17 : vector<1x256xf32> to vector<128x256xf32>
    %19 = arith.mulf %16, %18 : vector<128x256xf32>
    %cst_14 = arith.constant dense<0.000000e+00> : vector<128xf32>
    %20 = vector.multi_reduction <add>, %19, %cst_14 [1] : vector<128x256xf32> to vector<128xf32>
    %c0_15 = arith.constant 0 : index
    %c0_16 = arith.constant 0 : index
    %21 = memref.load %arg7[%c0_15, %c0_16] : memref<1x1xf32, #tpu.memory_space<smem>>
    %22 = vector.broadcast %21 : f32 to vector<128xf32>
    %23 = arith.addf %20, %22 : vector<128xf32>
    %24 = vector.shape_cast %23 : vector<128xf32> to vector<1x1x128xf32>
    %c0_17 = arith.constant 0 : index
    %c0_18 = arith.constant 0 : index
    %c0_19 = arith.constant 0 : index
    %25 = vector.load %arg8[%c0_17, %c0_18, %c0_19] : memref<1x1x128xf32, #tpu.memory_space<vmem>>, vector<1x1x128xf32>
    tpu.vector_store %arg8[%c0_17, %c0_18, %c0_19], %24 {strides = array<i32>} : memref<1x1x128xf32, #tpu.memory_space<vmem>>, vector<1x1x128xf32>,
    return
  }
  func.func @transform_0(%arg0: i32) -> (i32, i32) {
    %c0_i32 = arith.constant 0 : i32
    %c0_i32_0 = arith.constant 0 : i32
    return %arg0, %c0_i32 : i32, i32
  }
  func.func @transform_1(%arg0: i32) -> (i32, i32) {
    %c0_i32 = arith.constant 0 : i32
    %c0_i32_0 = arith.constant 0 : i32
    %c0_i32_1 = arith.constant 0 : i32
    return %c0_i32, %c0_i32_0 : i32, i32
  }
  func.func @transform_2(%arg0: i32) -> (i32, i32) {
    %c0_i32 = arith.constant 0 : i32
    %c0_i32_0 = arith.constant 0 : i32
    %c0_i32_1 = arith.constant 0 : i32
    return %c0_i32, %c0_i32_0 : i32, i32
  }
  func.func @transform_3(%arg0: i32) -> (i32, i32) {
    %c0_i32 = arith.constant 0 : i32
    %c0_i32_0 = arith.constant 0 : i32
    %c0_i32_1 = arith.constant 0 : i32
    return %c0_i32, %c0_i32_0 : i32, i32
  }
  func.func @transform_4(%arg0: i32) -> (i32, i32) {
    %c0_i32 = arith.constant 0 : i32
    %c0_i32_0 = arith.constant 0 : i32
    %c0_i32_1 = arith.constant 0 : i32
    return %c0_i32, %c0_i32_0 : i32, i32
  }
  func.func @transform_5(%arg0: i32) -> (i32, i32) {
    %c0_i32 = arith.constant 0 : i32
    %c0_i32_0 = arith.constant 0 : i32
    %c0_i32_1 = arith.constant 0 : i32
    return %c0_i32, %c0_i32_0 : i32, i32
  }
  func.func @transform_6(%arg0: i32) -> (i32, i32) {
    %c0_i32 = arith.constant 0 : i32
    %c0_i32_0 = arith.constant 0 : i32
    %c0_i32_1 = arith.constant 0 : i32
    return %c0_i32, %c0_i32_0 : i32, i32
  }
  func.func @transform_7(%arg0: i32) -> (i32, i32, i32) {
    %c0_i32 = arith.constant 0 : i32
    %c0_i32_0 = arith.constant 0 : i32
    %c0_i32_1 = arith.constant 0 : i32
    return %arg0, %c0_i32, %c0_i32_0 : i32, i32, i32
  }
}

</mosaic_0001>

<llo_original>
// kernel: tpu_custom_call.1
$region0: #{tpu_custom_call.1}
  #allocation0 [shape = 'u32[]', space=smem, size = 0x4, offset = 0x4, fixed_abs, tag = 'smem constant byte address 0x4 - core index']
  #allocation1 [shape = 'u32[144,128]{1,0:T(1,128)}', space=vmem, size = 0x12000, scoped, tag = 'internal scratch']
  #allocation2 [shape = 'f32[1,1]{1,0:T(1,128)S(6)}', space=smem, size = 0x200, scoped, tag = 'scoped memory for tpu_custom_call.1']
  %s0 = inlined_call_operand.vmem [shape: f32[128,32], index: 0, kind: input, shape index: {}]
  %s1 = inlined_call_operand.vmem [shape: bf16[32,256], index: 1, kind: input, shape index: {}]
  %s2 = inlined_call_operand.vmem [shape: f32[1,256], index: 2, kind: input, shape index: {}]
  %s3 = inlined_call_operand.hbm [shape: bf16[256,256], index: 3, kind: input, shape index: {}]
  %s4 = inlined_call_operand.vmem [shape: f32[1,256], index: 4, kind: input, shape index: {}]
  %s5 = inlined_call_operand.vmem [shape: f32[1,256], index: 5, kind: input, shape index: {}]
  %s6 = inlined_call_operand.<no memory space> [shape: f32[1,1], index: 6, kind: input, shape index: {}]
  %s7 = inlined_call_operand.hbm [shape: f32[1,1,128], index: 7, kind: output, shape index: {}]
  %s8 = sld [smem:[#allocation0]]
  $region42: #{tpu_custom_call.1} parent=0
    _
  %s10 = ssub.s32 1, %s8
  %s11 = scalar_select 0, %s10, %s8
  %12 = sst [smem:[#allocation2]] %s6
  $region1: #{tpu_custom_call.1} parent=0
    #allocation3 [shape = 'u8[131072]{0}', space=vmem, size = 0x20000, scoped, tag = 'input window, operand 3, single buffered']
    #allocation4 [shape = 's32[1]{0}', space=sflag, size = 0x4, scoped, tag = 'scoped memory for tpu_custom_call.1']
    #allocation5 [shape = 's32[1]{0}', space=sflag, size = 0x4, scoped, tag = 'scoped memory for tpu_custom_call.1']
    #allocation6 [shape = 'u8[512]{0}', space=vmem, size = 0x400, scoped, tag = 'output window, operand 0, single buffered']
    %13 = vsyncpa [#allocation4], 0
    %14 = vsyncpa [#allocation5], 0
    // Predicated region
    $region2: #{tpu_custom_call.1} parent=1 // pred_check
      _
    $region3: #{tpu_custom_call.1} parent=1 // pred_check_branch
      %16 = sbr.rel (0) target = $region5
    $region4: #{tpu_custom_call.1} parent=1 // pred_region
      _
    $region5: #{tpu_custom_call.1} parent=1 // pred_fallthru
      _
    // Predicated region
    $region6: #{tpu_custom_call.1} parent=1 // pred_check
      _
    $region7: #{tpu_custom_call.1} parent=1 // pred_check_branch
      %18 = sbr.rel (0) target = $region9
    $region8: #{tpu_custom_call.1} parent=1 // pred_region
      _
    $region9: #{tpu_custom_call.1} parent=1 // pred_fallthru
      _
    // Predicated region
    $region10: #{tpu_custom_call.1} parent=1 // pred_check
      _
    $region11: #{tpu_custom_call.1} parent=1 // pred_check_branch
      %20 = sbr.rel (0) target = $region13
    $region12: #{tpu_custom_call.1} parent=1 // pred_region
      _
    $region13: #{tpu_custom_call.1} parent=1 // pred_fallthru
      _
    // Predicated region
    $region14: #{tpu_custom_call.1} parent=1 // pred_check
      _
    $region15: #{tpu_custom_call.1} parent=1 // pred_check_branch
      %22 = sbr.rel (0) target = $region17
    $region16: #{tpu_custom_call.1} parent=1 // pred_region
      %s24 = ssub.s32 4096, 4096
      %25 = vsyncadd [#allocation4], %s24
      %s26 = sshll.u32 [#allocation3], 4
      %s27 = int_to_ptr.vmem [resolvable:$true] %s26
      %32 = dma.hbm_to_vmem [thread:$0]  %s3, 4096, %s27, [#allocation4], 128, 128, 8
    $region17: #{tpu_custom_call.1} parent=1 // pred_fallthru
      _
    // Predicated region
    $region18: #{tpu_custom_call.1} parent=1 // pred_check
      _
    $region19: #{tpu_custom_call.1} parent=1 // pred_check_branch
      %34 = sbr.rel (0) target = $region21
    $region20: #{tpu_custom_call.1} parent=1 // pred_region
      _
    $region21: #{tpu_custom_call.1} parent=1 // pred_fallthru
      _
    // Predicated region
    $region22: #{tpu_custom_call.1} parent=1 // pred_check
      _
    $region23: #{tpu_custom_call.1} parent=1 // pred_check_branch
      %36 = sbr.rel (0) target = $region25
    $region24: #{tpu_custom_call.1} parent=1 // pred_region
      _
    $region25: #{tpu_custom_call.1} parent=1 // pred_fallthru
      _
    // Predicated region
    $region26: #{tpu_custom_call.1} parent=1 // pred_check
      _
    $region27: #{tpu_custom_call.1} parent=1 // pred_check_branch
      %38 = sbr.rel (0) target = $region29
    $region28: #{tpu_custom_call.1} parent=1 // pred_region
      _
    $region29: #{tpu_custom_call.1} parent=1 // pred_fallthru
      _
    // Predicated region
    $region30: #{tpu_custom_call.1} parent=1 // pred_check
      _
    $region31: #{tpu_custom_call.1} parent=1 // pred_check_branch
      %40 = sbr.rel (0) target = $region33
    $region32: #{tpu_custom_call.1} parent=1 // pred_region
      %41 = dma.done [#allocation4], 4096
    $region33: #{tpu_custom_call.1} parent=1 // pred_fallthru
      _
    %v43 = vld [vmem:[%s0] sm:$0xff]
    %v44 = vld [vmem:[%s0 + $0x8] sm:$0xff]
    %v45 = vld [vmem:[%s0 + $0x10] sm:$0xff]
    %v46 = vld [vmem:[%s0 + $0x18] sm:$0xff]
    %v47 = vld [vmem:[%s0 + $0x20] sm:$0xff]
    %v48 = vld [vmem:[%s0 + $0x28] sm:$0xff]
    %v49 = vld [vmem:[%s0 + $0x30] sm:$0xff]
    %v50 = vld [vmem:[%s0 + $0x38] sm:$0xff]
    %v51 = vld [vmem:[%s0 + $0x40] sm:$0xff]
    %v52 = vld [vmem:[%s0 + $0x48] sm:$0xff]
    %v53 = vld [vmem:[%s0 + $0x50] sm:$0xff]
    %v54 = vld [vmem:[%s0 + $0x58] sm:$0xff]
    %v55 = vld [vmem:[%s0 + $0x60] sm:$0xff]
    %v56 = vld [vmem:[%s0 + $0x68] sm:$0xff]
    %v57 = vld [vmem:[%s0 + $0x70] sm:$0xff]
    %v58 = vld [vmem:[%s0 + $0x78] sm:$0xff]
    %v59 = vpack.c.bf16 %v44, %v43
    %v60 = vpack.c.bf16 %v46, %v45
    %v61 = vpack.c.bf16 %v48, %v47
    %v62 = vpack.c.bf16 %v50, %v49
    %v63 = vpack.c.bf16 %v52, %v51
    %v64 = vpack.c.bf16 %v54, %v53
    %v65 = vpack.c.bf16 %v56, %v55
    %v66 = vpack.c.bf16 %v58, %v57
    %v67 = vld [vmem:[%s1] sm:$0xff]
    %v68 = vld [vmem:[%s1 + $0x8] sm:$0xff]
    %v69 = vld [vmem:[%s1 + $0x10] sm:$0xff]
    %v70 = vld [vmem:[%s1 + $0x18] sm:$0xff]
    %v71 = vld [vmem:[%s2] sm:$0x3]
    %v73 = vlaneseq
    %v74 = vshrl.u32 %v73, 7
    %v75 = vsub.s32 0, %v74
    %v76 = vrot.slane %v71, %v75
    %v77 = vlaneseq
    %v78 = vshrl.u32 %v77, 7
    %v79 = vsub.s32 1, %v78
    %v80 = vrot.slane %v71, %v79
    %v87 = vunpack.c.l.b16 %v67
    %v88 = vunpack.c.h.b16 %v67
    %v89 = vunpack.c.l.b16 %v68
    %v90 = vunpack.c.h.b16 %v68
    %v91 = vunpack.c.l.b16 %v69
    %v92 = vunpack.c.h.b16 %v69
    %v93 = vunpack.c.l.b16 %v70
    %v94 = vunpack.c.h.b16 %v70
    %v95 = vpack.c.b16 %v89, %v87
    %v96 = vpack.c.b16 %v90, %v88
    %v97 = vpack.c.b16 %v93, %v91
    %v98 = vpack.c.b16 %v94, %v92
    %vm103 = vcmask 261120
    %v105 = vsel %vm103, %v59, 0
    %v108 = vsel %vm103, %v60, 0
    %v111 = vsel %vm103, %v61, 0
    %v114 = vsel %vm103, %v62, 0
    %v117 = vsel %vm103, %v63, 0
    %v120 = vsel %vm103, %v64, 0
    %v123 = vsel %vm103, %v65, 0
    %v126 = vsel %vm103, %v66, 0
    %128 = vmatprep.subr.bf16.mxu0 %v96
    %129 = vmatpush1.bf16.msra.mxu0 %v95
    %130 = vmatprep.subr.bf16.mxu0 %v98
    %131 = vmatpush1.bf16.msra.mxu0 %v97
    %132 = vmatprep.subr.bf16.mxu0 0
    %133 = vmatpush1.bf16.msra.mxu0 0
    %134 = vmatprep.subr.bf16.mxu0 0
    %135 = vmatpush1.bf16.msra.mxu0 0
    %136 = vmatprep.subr.bf16.mxu0 0
    %137 = vmatpush1.bf16.msra.mxu0 0
    %138 = vmatprep.subr.bf16.mxu0 0
    %139 = vmatpush1.bf16.msra.mxu0 0
    %140 = vmatprep.subr.bf16.mxu0 0
    %141 = vmatpush1.bf16.msra.mxu0 0
    %142 = vmatprep.subr.bf16.mxu0 0
    %143 = vmatpush1.bf16.msra.mxu0 0
    %144 = vmatprep.subr.bf16.mxu0 0
    %145 = vmatpush1.bf16.msra.mxu0 0
    %146 = vmatprep.subr.bf16.mxu0 0
    %147 = vmatpush1.bf16.msra.mxu0 0
    %148 = vmatprep.subr.bf16.mxu0 0
    %149 = vmatpush1.bf16.msra.mxu0 0
    %150 = vmatprep.subr.bf16.mxu0 0
    %151 = vmatpush1.bf16.msra.mxu0 0
    %152 = vmatprep.subr.bf16.mxu0 0
    %153 = vmatpush1.bf16.msra.mxu0 0
    %154 = vmatprep.subr.bf16.mxu0 0
    %155 = vmatpush1.bf16.msra.mxu0 0
    %156 = vmatprep.subr.bf16.mxu0 0
    %157 = vmatpush1.bf16.msra.mxu0 0
    %158 = vmatprep.subr.bf16.mxu0 0
    %159 = vmatpush1.bf16.msra.mxu0 0
    %160 = vmatprep.mubr.bf16.mxu0 0
    %161 = vmatmul.mubr.bf16.gmra.mrb[0].mxu0 %v105
    %v162 = vpop.f32.mrb[0].mxu0
    %v163 = vadd.f32 %v76, %v162
    %v164 = vpop.f32.mrb[0].mxu0
    %v165 = vadd.f32 %v80, %v164
    %v166 = vpop.f32.mrb[0].mxu0
    %v167 = vadd.f32 %v76, %v166
    %v168 = vpop.f32.mrb[0].mxu0
    %v169 = vadd.f32 %v80, %v168
    %170 = vmatprep.mubr.bf16.mxu0 0
    %171 = vmatmul.mubr.bf16.gmra.mrb[0].mxu0 %v108
    %v172 = vpop.f32.mrb[0].mxu0
    %v173 = vadd.f32 %v76, %v172
    %v174 = vpop.f32.mrb[0].mxu0
    %v175 = vadd.f32 %v80, %v174
    %v176 = vpop.f32.mrb[0].mxu0
    %v177 = vadd.f32 %v76, %v176
    %v178 = vpop.f32.mrb[0].mxu0
    %v179 = vadd.f32 %v80, %v178
    %180 = vmatprep.mubr.bf16.mxu0 0
    %181 = vmatmul.mubr.bf16.gmra.mrb[0].mxu0 %v111
    %v182 = vpop.f32.mrb[0].mxu0
    %v183 = vadd.f32 %v76, %v182
    %v184 = vpop.f32.mrb[0].mxu0
    %v185 = vadd.f32 %v80, %v184
    %v186 = vpop.f32.mrb[0].mxu0
    %v187 = vadd.f32 %v76, %v186
    %v188 = vpop.f32.mrb[0].mxu0
    %v189 = vadd.f32 %v80, %v188
    %190 = vmatprep.mubr.bf16.mxu0 0
    %191 = vmatmul.mubr.bf16.gmra.mrb[0].mxu0 %v114
    %v192 = vpop.f32.mrb[0].mxu0
    %v193 = vadd.f32 %v76, %v192
    %v194 = vpop.f32.mrb[0].mxu0
    %v195 = vadd.f32 %v80, %v194
    %v196 = vpop.f32.mrb[0].mxu0
    %v197 = vadd.f32 %v76, %v196
    %v198 = vpop.f32.mrb[0].mxu0
    %v199 = vadd.f32 %v80, %v198
    %200 = vmatprep.mubr.bf16.mxu0 0
    %201 = vmatmul.mubr.bf16.gmra.mrb[0].mxu0 %v117
    %v202 = vpop.f32.mrb[0].mxu0
    %v203 = vadd.f32 %v76, %v202
    %v204 = vpop.f32.mrb[0].mxu0
    %v205 = vadd.f32 %v80, %v204
    %v206 = vpop.f32.mrb[0].mxu0
    %v207 = vadd.f32 %v76, %v206
    %v208 = vpop.f32.mrb[0].mxu0
    %v209 = vadd.f32 %v80, %v208
    %210 = vmatprep.mubr.bf16.mxu0 0
    %211 = vmatmul.mubr.bf16.gmra.mrb[0].mxu0 %v120
    %v212 = vpop.f32.mrb[0].mxu0
    %v213 = vadd.f32 %v76, %v212
    %v214 = vpop.f32.mrb[0].mxu0
    %v215 = vadd.f32 %v80, %v214
    %v216 = vpop.f32.mrb[0].mxu0
    %v217 = vadd.f32 %v76, %v216
    %v218 = vpop.f32.mrb[0].mxu0
    %v219 = vadd.f32 %v80, %v218
    %220 = vmatprep.mubr.bf16.mxu0 0
    %221 = vmatmul.mubr.bf16.gmra.mrb[0].mxu0 %v123
    %v222 = vpop.f32.mrb[0].mxu0
    %v223 = vadd.f32 %v76, %v222
    %v224 = vpop.f32.mrb[0].mxu0
    %v225 = vadd.f32 %v80, %v224
    %v226 = vpop.f32.mrb[0].mxu0
    %v227 = vadd.f32 %v76, %v226
    %v228 = vpop.f32.mrb[0].mxu0
    %v229 = vadd.f32 %v80, %v228
    %230 = vmatprep.mubr.bf16.mxu0 0
    %231 = vmatmul.mubr.bf16.gmra.mrb[0].mxu0 %v126
    %v232 = vpop.f32.mrb[0].mxu0
    %v233 = vadd.f32 %v76, %v232
    %v234 = vpop.f32.mrb[0].mxu0
    %v235 = vadd.f32 %v80, %v234
    %v236 = vpop.f32.mrb[0].mxu0
    %v237 = vadd.f32 %v76, %v236
    %v238 = vpop.f32.mrb[0].mxu0
    %v239 = vadd.f32 %v80, %v238
    %240 = vdwg.mxu0
    %v241 = vmax.f32 %v163, 0.0
    %v242 = vmax.f32 %v165, 0.0
    %v243 = vmax.f32 %v167, 0.0
    %v244 = vmax.f32 %v169, 0.0
    %v245 = vmax.f32 %v173, 0.0
    %v246 = vmax.f32 %v175, 0.0
    %v247 = vmax.f32 %v177, 0.0
    %v248 = vmax.f32 %v179, 0.0
    %v249 = vmax.f32 %v183, 0.0
    %v250 = vmax.f32 %v185, 0.0
    %v251 = vmax.f32 %v187, 0.0
    %v252 = vmax.f32 %v189, 0.0
    %v253 = vmax.f32 %v193, 0.0
    %v254 = vmax.f32 %v195, 0.0
    %v255 = vmax.f32 %v197, 0.0
    %v256 = vmax.f32 %v199, 0.0
    %v257 = vmax.f32 %v203, 0.0
    %v258 = vmax.f32 %v205, 0.0
    %v259 = vmax.f32 %v207, 0.0
    %v260 = vmax.f32 %v209, 0.0
    %v261 = vmax.f32 %v213, 0.0
    %v262 = vmax.f32 %v215, 0.0
    %v263 = vmax.f32 %v217, 0.0
    %v264 = vmax.f32 %v219, 0.0
    %v265 = vmax.f32 %v223, 0.0
    %v266 = vmax.f32 %v225, 0.0
    %v267 = vmax.f32 %v227, 0.0
    %v268 = vmax.f32 %v229, 0.0
    %v269 = vmax.f32 %v233, 0.0
    %v270 = vmax.f32 %v235, 0.0
    %v271 = vmax.f32 %v237, 0.0
    %v272 = vmax.f32 %v239, 0.0
    %v273 = vpack.c.bf16 %v243, %v241
    %v274 = vpack.c.bf16 %v244, %v242
    %v275 = vpack.c.bf16 %v247, %v245
    %v276 = vpack.c.bf16 %v248, %v246
    %v277 = vpack.c.bf16 %v251, %v249
    %v278 = vpack.c.bf16 %v252, %v250
    %v279 = vpack.c.bf16 %v255, %v253
    %v280 = vpack.c.bf16 %v256, %v254
    %v281 = vpack.c.bf16 %v259, %v257
    %v282 = vpack.c.bf16 %v260, %v258
    %v283 = vpack.c.bf16 %v263, %v261
    %v284 = vpack.c.bf16 %v264, %v262
    %v285 = vpack.c.bf16 %v267, %v265
    %v286 = vpack.c.bf16 %v268, %v266
    %v287 = vpack.c.bf16 %v271, %v269
    %v288 = vpack.c.bf16 %v272, %v270
    %v289 = vld [vmem:[#allocation3] sm:$0xff]
    %v290 = vld [vmem:[#allocation3 + $0x8] sm:$0xff]
    %v291 = vld [vmem:[#allocation3 + $0x10] sm:$0xff]
    %v292 = vld [vmem:[#allocation3 + $0x18] sm:$0xff]
    %v293 = vld [vmem:[#allocation3 + $0x20] sm:$0xff]
    %v294 = vld [vmem:[#allocation3 + $0x28] sm:$0xff]
    %v295 = vld [vmem:[#allocation3 + $0x30] sm:$0xff]
    %v296 = vld [vmem:[#allocation3 + $0x38] sm:$0xff]
    %v297 = vld [vmem:[#allocation3 + $0x40] sm:$0xff]
    %v298 = vld [vmem:[#allocation3 + $0x48] sm:$0xff]
    %v299 = vld [vmem:[#allocation3 + $0x50] sm:$0xff]
    %v300 = vld [vmem:[#allocation3 + $0x58] sm:$0xff]
    %v301 = vld [vmem:[#allocation3 + $0x60] sm:$0xff]
    %v302 = vld [vmem:[#allocation3 + $0x68] sm:$0xff]
    %v303 = vld [vmem:[#allocation3 + $0x70] sm:$0xff]
    %v304 = vld [vmem:[#allocation3 + $0x78] sm:$0xff]
    %v305 = vld [vmem:[#allocation3 + $0x80] sm:$0xff]
    %v306 = vld [vmem:[#allocation3 + $0x88] sm:$0xff]
    %v307 = vld [vmem:[#allocation3 + $0x90] sm:$0xff]
    %v308 = vld [vmem:[#allocation3 + $0x98] sm:$0xff]
    %v309 = vld [vmem:[#allocation3 + $0xa0] sm:$0xff]
    %v310 = vld [vmem:[#allocation3 + $0xa8] sm:$0xff]
    %v311 = vld [vmem:[#allocation3 + $0xb0] sm:$0xff]
    %v312 = vld [vmem:[#allocation3 + $0xb8] sm:$0xff]
    %v313 = vld [vmem:[#allocation3 + $0xc0] sm:$0xff]
    %v314 = vld [vmem:[#allocation3 + $0xc8] sm:$0xff]
    %v315 = vld [vmem:[#allocation3 + $0xd0] sm:$0xff]
    %v316 = vld [vmem:[#allocation3 + $0xd8] sm:$0xff]
    %v317 = vld [vmem:[#allocation3 + $0xe0] sm:$0xff]
    %v318 = vld [vmem:[#allocation3 + $0xe8] sm:$0xff]
    %v319 = vld [vmem:[#allocation3 + $0xf0] sm:$0xff]
    %v320 = vld [vmem:[#allocation3 + $0xf8] sm:$0xff]
    %v321 = vld [vmem:[%s4] sm:$0x3]
    %v323 = vlaneseq
    %v324 = vshrl.u32 %v323, 7
    %v325 = vsub.s32 0, %v324
    %v326 = vrot.slane %v321, %v325
    %v327 = vlaneseq
    %v328 = vshrl.u32 %v327, 7
    %v329 = vsub.s32 1, %v328
    %v330 = vrot.slane %v321, %v329
    %v365 = vunpack.c.l.b16 %v289
    %v366 = vunpack.c.h.b16 %v289
    %v367 = vunpack.c.l.b16 %v290
    %v368 = vunpack.c.h.b16 %v290
    %v369 = vunpack.c.l.b16 %v291
    %v370 = vunpack.c.h.b16 %v291
    %v371 = vunpack.c.l.b16 %v292
    %v372 = vunpack.c.h.b16 %v292
    %v373 = vunpack.c.l.b16 %v293
    %v374 = vunpack.c.h.b16 %v293
    %v375 = vunpack.c.l.b16 %v294
    %v376 = vunpack.c.h.b16 %v294
    %v377 = vunpack.c.l.b16 %v295
    %v378 = vunpack.c.h.b16 %v295
    %v379 = vunpack.c.l.b16 %v296
    %v380 = vunpack.c.h.b16 %v296
    %v381 = vunpack.c.l.b16 %v297
    %v382 = vunpack.c.h.b16 %v297
    %v383 = vunpack.c.l.b16 %v298
    %v384 = vunpack.c.h.b16 %v298
    %v385 = vunpack.c.l.b16 %v299
    %v386 = vunpack.c.h.b16 %v299
    %v387 = vunpack.c.l.b16 %v300
    %v388 = vunpack.c.h.b16 %v300
    %v389 = vunpack.c.l.b16 %v301
    %v390 = vunpack.c.h.b16 %v301
    %v391 = vunpack.c.l.b16 %v302
    %v392 = vunpack.c.h.b16 %v302
    %v393 = vunpack.c.l.b16 %v303
    %v394 = vunpack.c.h.b16 %v303
    %v395 = vunpack.c.l.b16 %v304
    %v396 = vunpack.c.h.b16 %v304
    %v397 = vunpack.c.l.b16 %v305
    %v398 = vunpack.c.h.b16 %v305
    %v399 = vunpack.c.l.b16 %v306
    %v400 = vunpack.c.h.b16 %v306
    %v401 = vunpack.c.l.b16 %v307
    %v402 = vunpack.c.h.b16 %v307
    %v403 = vunpack.c.l.b16 %v308
    %v404 = vunpack.c.h.b16 %v308
    %v405 = vunpack.c.l.b16 %v309
    %v406 = vunpack.c.h.b16 %v309
    %v407 = vunpack.c.l.b16 %v310
    %v408 = vunpack.c.h.b16 %v310
    %v409 = vunpack.c.l.b16 %v311
    %v410 = vunpack.c.h.b16 %v311
    %v411 = vunpack.c.l.b16 %v312
    %v412 = vunpack.c.h.b16 %v312
    %v413 = vunpack.c.l.b16 %v313
    %v414 = vunpack.c.h.b16 %v313
    %v415 = vunpack.c.l.b16 %v314
    %v416 = vunpack.c.h.b16 %v314
    %v417 = vunpack.c.l.b16 %v315
    %v418 = vunpack.c.h.b16 %v315
    %v419 = vunpack.c.l.b16 %v316
    %v420 = vunpack.c.h.b16 %v316
    %v421 = vunpack.c.l.b16 %v317
    %v422 = vunpack.c.h.b16 %v317
    %v423 = vunpack.c.l.b16 %v318
    %v424 = vunpack.c.h.b16 %v318
    %v425 = vunpack.c.l.b16 %v319
    %v426 = vunpack.c.h.b16 %v319
    %v427 = vunpack.c.l.b16 %v320
    %v428 = vunpack.c.h.b16 %v320
    %v429 = vpack.c.b16 %v367, %v365
    %v430 = vpack.c.b16 %v368, %v366
    %v431 = vpack.c.b16 %v371, %v369
    %v432 = vpack.c.b16 %v372, %v370
    %v433 = vpack.c.b16 %v375, %v373
    %v434 = vpack.c.b16 %v376, %v374
    %v435 = vpack.c.b16 %v379, %v377
    %v436 = vpack.c.b16 %v380, %v378
    %v437 = vpack.c.b16 %v383, %v381
    %v438 = vpack.c.b16 %v384, %v382
    %v439 = vpack.c.b16 %v387, %v385
    %v440 = vpack.c.b16 %v388, %v386
    %v441 = vpack.c.b16 %v391, %v389
    %v442 = vpack.c.b16 %v392, %v390
    %v443 = vpack.c.b16 %v395, %v393
    %v444 = vpack.c.b16 %v396, %v394
    %v445 = vpack.c.b16 %v399, %v397
    %v446 = vpack.c.b16 %v400, %v398
    %v447 = vpack.c.b16 %v403, %v401
    %v448 = vpack.c.b16 %v404, %v402
    %v449 = vpack.c.b16 %v407, %v405
    %v450 = vpack.c.b16 %v408, %v406
    %v451 = vpack.c.b16 %v411, %v409
    %v452 = vpack.c.b16 %v412, %v410
    %v453 = vpack.c.b16 %v415, %v413
    %v454 = vpack.c.b16 %v416, %v414
    %v455 = vpack.c.b16 %v419, %v417
    %v456 = vpack.c.b16 %v420, %v418
    %v457 = vpack.c.b16 %v423, %v421
    %v458 = vpack.c.b16 %v424, %v422
    %v459 = vpack.c.b16 %v427, %v425
    %v460 = vpack.c.b16 %v428, %v426
    %493 = vmatprep.subr.bf16.mxu0 %v430
    %494 = vmatpush1.bf16.msra.mxu0 %v429
    %495 = vmatprep.subr.bf16.mxu0 %v432
    %496 = vmatpush1.bf16.msra.mxu0 %v431
    %497 = vmatprep.subr.bf16.mxu0 %v434
    %498 = vmatpush1.bf16.msra.mxu0 %v433
    %499 = vmatprep.subr.bf16.mxu0 %v436
    %500 = vmatpush1.bf16.msra.mxu0 %v435
    %501 = vmatprep.subr.bf16.mxu0 %v438
    %502 = vmatpush1.bf16.msra.mxu0 %v437
    %503 = vmatprep.subr.bf16.mxu0 %v440
    %504 = vmatpush1.bf16.msra.mxu0 %v439
    %505 = vmatprep.subr.bf16.mxu0 %v442
    %506 = vmatpush1.bf16.msra.mxu0 %v441
    %507 = vmatprep.subr.bf16.mxu0 %v444
    %508 = vmatpush1.bf16.msra.mxu0 %v443
    %509 = vmatprep.subr.bf16.mxu0 %v446
    %510 = vmatpush1.bf16.msra.mxu0 %v445
    %511 = vmatprep.subr.bf16.mxu0 %v448
    %512 = vmatpush1.bf16.msra.mxu0 %v447
    %513 = vmatprep.subr.bf16.mxu0 %v450
    %514 = vmatpush1.bf16.msra.mxu0 %v449
    %515 = vmatprep.subr.bf16.mxu0 %v452
    %516 = vmatpush1.bf16.msra.mxu0 %v451
    %517 = vmatprep.subr.bf16.mxu0 %v454
    %518 = vmatpush1.bf16.msra.mxu0 %v453
    %519 = vmatprep.subr.bf16.mxu0 %v456
    %520 = vmatpush1.bf16.msra.mxu0 %v455
    %521 = vmatprep.subr.bf16.mxu0 %v458
    %522 = vmatpush1.bf16.msra.mxu0 %v457
    %523 = vmatprep.subr.bf16.mxu0 %v460
    %524 = vmatpush1.bf16.msra.mxu0 %v459
    %525 = vmatprep.mubr.bf16.mxu0 %v274
    %526 = vmatmul.mubr.bf16.gmra.mrb[0].mxu0 %v273
    %v527 = vpop.f32.mrb[0].mxu0
    %v528 = vadd.f32 %v326, %v527
    %v529 = vpop.f32.mrb[0].mxu0
    %v530 = vadd.f32 %v330, %v529
    %v531 = vpop.f32.mrb[0].mxu0
    %v532 = vadd.f32 %v326, %v531
    %v533 = vpop.f32.mrb[0].mxu0
    %v534 = vadd.f32 %v330, %v533
    %535 = vmatprep.mubr.bf16.mxu0 %v276
    %536 = vmatmul.mubr.bf16.gmra.mrb[0].mxu0 %v275
    %v537 = vpop.f32.mrb[0].mxu0
    %v538 = vadd.f32 %v326, %v537
    %v539 = vpop.f32.mrb[0].mxu0
    %v540 = vadd.f32 %v330, %v539
    %v541 = vpop.f32.mrb[0].mxu0
    %v542 = vadd.f32 %v326, %v541
    %v543 = vpop.f32.mrb[0].mxu0
    %v544 = vadd.f32 %v330, %v543
    %545 = vmatprep.mubr.bf16.mxu0 %v278
    %546 = vmatmul.mubr.bf16.gmra.mrb[0].mxu0 %v277
    %v547 = vpop.f32.mrb[0].mxu0
    %v548 = vadd.f32 %v326, %v547
    %v549 = vpop.f32.mrb[0].mxu0
    %v550 = vadd.f32 %v330, %v549
    %v551 = vpop.f32.mrb[0].mxu0
    %v552 = vadd.f32 %v326, %v551
    %v553 = vpop.f32.mrb[0].mxu0
    %v554 = vadd.f32 %v330, %v553
    %555 = vmatprep.mubr.bf16.mxu0 %v280
    %556 = vmatmul.mubr.bf16.gmra.mrb[0].mxu0 %v279
    %v557 = vpop.f32.mrb[0].mxu0
    %v558 = vadd.f32 %v326, %v557
    %v559 = vpop.f32.mrb[0].mxu0
    %v560 = vadd.f32 %v330, %v559
    %v561 = vpop.f32.mrb[0].mxu0
    %v562 = vadd.f32 %v326, %v561
    %v563 = vpop.f32.mrb[0].mxu0
    %v564 = vadd.f32 %v330, %v563
    %565 = vmatprep.mubr.bf16.mxu0 %v282
    %566 = vmatmul.mubr.bf16.gmra.mrb[0].mxu0 %v281
    %v567 = vpop.f32.mrb[0].mxu0
    %v568 = vadd.f32 %v326, %v567
    %v569 = vpop.f32.mrb[0].mxu0
    %v570 = vadd.f32 %v330, %v569
    %v571 = vpop.f32.mrb[0].mxu0
    %v572 = vadd.f32 %v326, %v571
    %v573 = vpop.f32.mrb[0].mxu0
    %v574 = vadd.f32 %v330, %v573
    %575 = vmatprep.mubr.bf16.mxu0 %v284
    %576 = vmatmul.mubr.bf16.gmra.mrb[0].mxu0 %v283
    %v577 = vpop.f32.mrb[0].mxu0
    %v578 = vadd.f32 %v326, %v577
    %v579 = vpop.f32.mrb[0].mxu0
    %v580 = vadd.f32 %v330, %v579
    %v581 = vpop.f32.mrb[0].mxu0
    %v582 = vadd.f32 %v326, %v581
    %v583 = vpop.f32.mrb[0].mxu0
    %v584 = vadd.f32 %v330, %v583
    %585 = vmatprep.mubr.bf16.mxu0 %v286
    %586 = vmatmul.mubr.bf16.gmra.mrb[0].mxu0 %v285
    %v587 = vpop.f32.mrb[0].mxu0
    %v588 = vadd.f32 %v326, %v587
    %v589 = vpop.f32.mrb[0].mxu0
    %v590 = vadd.f32 %v330, %v589
    %v591 = vpop.f32.mrb[0].mxu0
    %v592 = vadd.f32 %v326, %v591
    %v593 = vpop.f32.mrb[0].mxu0
    %v594 = vadd.f32 %v330, %v593
    %595 = vmatprep.mubr.bf16.mxu0 %v288
    %596 = vmatmul.mubr.bf16.gmra.mrb[0].mxu0 %v287
    %v597 = vpop.f32.mrb[0].mxu0
    %v598 = vadd.f32 %v326, %v597
    %v599 = vpop.f32.mrb[0].mxu0
    %v600 = vadd.f32 %v330, %v599
    %v601 = vpop.f32.mrb[0].mxu0
    %v602 = vadd.f32 %v326, %v601
    %v603 = vpop.f32.mrb[0].mxu0
    %v604 = vadd.f32 %v330, %v603
    %605 = vdwg.mxu0
    %v606 = vmax.f32 %v528, 0.0
    %v607 = vmax.f32 %v530, 0.0
    %v608 = vmax.f32 %v532, 0.0
    %v609 = vmax.f32 %v534, 0.0
    %v610 = vmax.f32 %v538, 0.0
    %v611 = vmax.f32 %v540, 0.0
    %v612 = vmax.f32 %v542, 0.0
    %v613 = vmax.f32 %v544, 0.0
    %v614 = vmax.f32 %v548, 0.0
    %v615 = vmax.f32 %v550, 0.0
    %v616 = vmax.f32 %v552, 0.0
    %v617 = vmax.f32 %v554, 0.0
    %v618 = vmax.f32 %v558, 0.0
    %v619 = vmax.f32 %v560, 0.0
    %v620 = vmax.f32 %v562, 0.0
    %v621 = vmax.f32 %v564, 0.0
    %v622 = vmax.f32 %v568, 0.0
    %v623 = vmax.f32 %v570, 0.0
    %v624 = vmax.f32 %v572, 0.0
    %v625 = vmax.f32 %v574, 0.0
    %v626 = vmax.f32 %v578, 0.0
    %v627 = vmax.f32 %v580, 0.0
    %v628 = vmax.f32 %v582, 0.0
    %v629 = vmax.f32 %v584, 0.0
    %v630 = vmax.f32 %v588, 0.0
    %v631 = vmax.f32 %v590, 0.0
    %v632 = vmax.f32 %v592, 0.0
    %v633 = vmax.f32 %v594, 0.0
    %v634 = vmax.f32 %v598, 0.0
    %v635 = vmax.f32 %v600, 0.0
    %v636 = vmax.f32 %v602, 0.0
    %v637 = vmax.f32 %v604, 0.0
    %v638 = vld [vmem:[%s5] sm:$0x3]
    %v640 = vlaneseq
    %v641 = vshrl.u32 %v640, 7
    %v642 = vsub.s32 0, %v641
    %v643 = vrot.slane %v638, %v642
    %v644 = vlaneseq
    %v645 = vshrl.u32 %v644, 7
    %v646 = vsub.s32 1, %v645
    %v647 = vrot.slane %v638, %v646
    %v650 = vmul.f32 %v606, %v643
    %v651 = vmul.f32 %v607, %v647
    %v652 = vmul.f32 %v608, %v643
    %v653 = vmul.f32 %v609, %v647
    %v654 = vmul.f32 %v610, %v643
    %v655 = vmul.f32 %v611, %v647
    %v656 = vmul.f32 %v612, %v643
    %v657 = vmul.f32 %v613, %v647
    %v658 = vmul.f32 %v614, %v643
    %v659 = vmul.f32 %v615, %v647
    %v660 = vmul.f32 %v616, %v643
    %v661 = vmul.f32 %v617, %v647
    %v662 = vmul.f32 %v618, %v643
    %v663 = vmul.f32 %v619, %v647
    %v664 = vmul.f32 %v620, %v643
    %v665 = vmul.f32 %v621, %v647
    %v666 = vmul.f32 %v622, %v643
    %v667 = vmul.f32 %v623, %v647
    %v668 = vmul.f32 %v624, %v643
    %v669 = vmul.f32 %v625, %v647
    %v670 = vmul.f32 %v626, %v643
    %v671 = vmul.f32 %v627, %v647
    %v672 = vmul.f32 %v628, %v643
    %v673 = vmul.f32 %v629, %v647
    %v674 = vmul.f32 %v630, %v643
    %v675 = vmul.f32 %v631, %v647
    %v676 = vmul.f32 %v632, %v643
    %v677 = vmul.f32 %v633, %v647
    %v678 = vmul.f32 %v634, %v643
    %v679 = vmul.f32 %v635, %v647
    %v680 = vmul.f32 %v636, %v643
    %v681 = vmul.f32 %v637, %v647
    %v682 = vadd.f32 %v650, %v651
    %683 = vadd.xlane.f32.xlu0 %v682
    %v684 = vpop.xlane.xlu0 %683
    %v685 = vadd.f32 %v652, %v653
    %686 = vadd.xlane.f32.xlu0 %v685
    %v687 = vpop.xlane.xlu0 %686
    %v688 = vadd.f32 %v654, %v655
    %689 = vadd.xlane.f32.xlu0 %v688
    %v690 = vpop.xlane.xlu0 %689
    %v691 = vadd.f32 %v656, %v657
    %692 = vadd.xlane.f32.xlu0 %v691
    %v693 = vpop.xlane.xlu0 %692
    %v694 = vadd.f32 %v658, %v659
    %695 = vadd.xlane.f32.xlu0 %v694
    %v696 = vpop.xlane.xlu0 %695
    %v697 = vadd.f32 %v660, %v661
    %698 = vadd.xlane.f32.xlu0 %v697
    %v699 = vpop.xlane.xlu0 %698
    %v700 = vadd.f32 %v662, %v663
    %701 = vadd.xlane.f32.xlu0 %v700
    %v702 = vpop.xlane.xlu0 %701
    %v703 = vadd.f32 %v664, %v665
    %704 = vadd.xlane.f32.xlu0 %v703
    %v705 = vpop.xlane.xlu0 %704
    %v706 = vadd.f32 %v666, %v667
    %707 = vadd.xlane.f32.xlu0 %v706
    %v708 = vpop.xlane.xlu0 %707
    %v709 = vadd.f32 %v668, %v669
    %710 = vadd.xlane.f32.xlu0 %v709
    %v711 = vpop.xlane.xlu0 %710
    %v712 = vadd.f32 %v670, %v671
    %713 = vadd.xlane.f32.xlu0 %v712
    %v714 = vpop.xlane.xlu0 %713
    %v715 = vadd.f32 %v672, %v673
    %716 = vadd.xlane.f32.xlu0 %v715
    %v717 = vpop.xlane.xlu0 %716
    %v718 = vadd.f32 %v674, %v675
    %719 = vadd.xlane.f32.xlu0 %v718
    %v720 = vpop.xlane.xlu0 %719
    %v721 = vadd.f32 %v676, %v677
    %722 = vadd.xlane.f32.xlu0 %v721
    %v723 = vpop.xlane.xlu0 %722
    %v724 = vadd.f32 %v678, %v679
    %725 = vadd.xlane.f32.xlu0 %v724
    %v726 = vpop.xlane.xlu0 %725
    %v727 = vadd.f32 %v680, %v681
    %728 = vadd.xlane.f32.xlu0 %v727
    %v729 = vpop.xlane.xlu0 %728
    %s730 = sld [smem:[#allocation2]]
    %v731 = vstv %s730
    %v732 = vadd.f32 %v684, %v731
    %v733 = vadd.f32 %v687, %v731
    %v734 = vadd.f32 %v690, %v731
    %v735 = vadd.f32 %v693, %v731
    %v736 = vadd.f32 %v696, %v731
    %v737 = vadd.f32 %v699, %v731
    %v738 = vadd.f32 %v702, %v731
    %v739 = vadd.f32 %v705, %v731
    %v740 = vadd.f32 %v708, %v731
    %v741 = vadd.f32 %v711, %v731
    %v742 = vadd.f32 %v714, %v731
    %v743 = vadd.f32 %v717, %v731
    %v744 = vadd.f32 %v720, %v731
    %v745 = vadd.f32 %v723, %v731
    %v746 = vadd.f32 %v726, %v731
    %v747 = vadd.f32 %v729, %v731
    %v764 = vlaneseq
    %v765 = vand.u32 %v764, 127
    %v766 = vlaneseq
    %v767 = vshrl.u32 %v766, 7
    %v768 = vsub.s32 %v765, %v767
    %v769 = vrot.slane %v732, %v768
    %v770 = vadd.s32 %v765, 4294967288
    %v771 = vlaneseq
    %v772 = vshrl.u32 %v771, 7
    %v773 = vsub.s32 %v770, %v772
    %v774 = vrot.slane %v733, %v773
    %vm775 = vcmask 130112
    %v776 = vsel %vm775, %v774, %v769
    %v777 = vadd.s32 %v765, 4294967280
    %v778 = vlaneseq
    %v779 = vshrl.u32 %v778, 7
    %v780 = vsub.s32 %v777, %v779
    %v781 = vrot.slane %v734, %v780
    %vm782 = vcmask 195712
    %v783 = vsel %vm782, %v781, %v776
    %v784 = vadd.s32 %v765, 4294967272
    %v785 = vlaneseq
    %v786 = vshrl.u32 %v785, 7
    %v787 = vsub.s32 %v784, %v786
    %v788 = vrot.slane %v735, %v787
    %vm789 = vcmask 261312
    %v790 = vsel %vm789, %v788, %v783
    %v791 = vadd.s32 %v765, 4294967264
    %v792 = vlaneseq
    %v793 = vshrl.u32 %v792, 7
    %v794 = vsub.s32 %v791, %v793
    %v795 = vrot.slane %v736, %v794
    %vm796 = vcmask 326912
    %v797 = vsel %vm796, %v795, %v790
    %v798 = vadd.s32 %v765, 4294967256
    %v799 = vlaneseq
    %v800 = vshrl.u32 %v799, 7
    %v801 = vsub.s32 %v798, %v800
    %v802 = vrot.slane %v737, %v801
    %vm803 = vcmask 392512
    %v804 = vsel %vm803, %v802, %v797
    %v805 = vadd.s32 %v765, 4294967248
    %v806 = vlaneseq
    %v807 = vshrl.u32 %v806, 7
    %v808 = vsub.s32 %v805, %v807
    %v809 = vrot.slane %v738, %v808
    %vm810 = vcmask 458112
    %v811 = vsel %vm810, %v809, %v804
    %v812 = vadd.s32 %v765, 4294967240
    %v813 = vlaneseq
    %v814 = vshrl.u32 %v813, 7
    %v815 = vsub.s32 %v812, %v814
    %v816 = vrot.slane %v739, %v815
    %vm817 = vcmask 523712
    %v818 = vsel %vm817, %v816, %v811
    %v819 = vadd.s32 %v765, 4294967232
    %v820 = vlaneseq
    %v821 = vshrl.u32 %v820, 7
    %v822 = vsub.s32 %v819, %v821
    %v823 = vrot.slane %v740, %v822
    %vm824 = vcmask 589312
    %v825 = vsel %vm824, %v823, %v818
    %v826 = vadd.s32 %v765, 4294967224
    %v827 = vlaneseq
    %v828 = vshrl.u32 %v827, 7
    %v829 = vsub.s32 %v826, %v828
    %v830 = vrot.slane %v741, %v829
    %vm831 = vcmask 654912
    %v832 = vsel %vm831, %v830, %v825
    %v833 = vadd.s32 %v765, 4294967216
    %v834 = vlaneseq
    %v835 = vshrl.u32 %v834, 7
    %v836 = vsub.s32 %v833, %v835
    %v837 = vrot.slane %v742, %v836
    %vm838 = vcmask 720512
    %v839 = vsel %vm838, %v837, %v832
    %v840 = vadd.s32 %v765, 4294967208
    %v841 = vlaneseq
    %v842 = vshrl.u32 %v841, 7
    %v843 = vsub.s32 %v840, %v842
    %v844 = vrot.slane %v743, %v843
    %vm845 = vcmask 786112
    %v846 = vsel %vm845, %v844, %v839
    %v847 = vadd.s32 %v765, 4294967200
    %v848 = vlaneseq
    %v849 = vshrl.u32 %v848, 7
    %v850 = vsub.s32 %v847, %v849
    %v851 = vrot.slane %v744, %v850
    %vm852 = vcmask 851712
    %v853 = vsel %vm852, %v851, %v846
    %v854 = vadd.s32 %v765, 4294967192
    %v855 = vlaneseq
    %v856 = vshrl.u32 %v855, 7
    %v857 = vsub.s32 %v854, %v856
    %v858 = vrot.slane %v745, %v857
    %vm859 = vcmask 917312
    %v860 = vsel %vm859, %v858, %v853
    %v861 = vadd.s32 %v765, 4294967184
    %v862 = vlaneseq
    %v863 = vshrl.u32 %v862, 7
    %v864 = vsub.s32 %v861, %v863
    %v865 = vrot.slane %v746, %v864
    %vm866 = vcmask 982912
    %v867 = vsel %vm866, %v865, %v860
    %v868 = vadd.s32 %v765, 4294967176
    %v869 = vlaneseq
    %v870 = vshrl.u32 %v869, 7
    %v871 = vsub.s32 %v868, %v870
    %v872 = vrot.slane %v747, %v871
    %vm873 = vcmask 1048512
    %v874 = vsel %vm873, %v872, %v867
    %876 = vst [vmem:[#allocation6] sm:$0x1] %v874
    // Predicated region
    $region34: #{tpu_custom_call.1} parent=1 // pred_check
      _
    $region35: #{tpu_custom_call.1} parent=1 // pred_check_branch
      %878 = sbr.rel (0) target = $region37
    $region36: #{tpu_custom_call.1} parent=1 // pred_region
      %s880 = ssub.s32 16, 16
      %881 = vsyncadd [#allocation5], %s880
      %s883 = sshll.u32 [#allocation6], 4
      %s884 = int_to_ptr.vmem [resolvable:$true] %s883
      %886 = dma.vmem_to_hbm [thread:$0]  %s884, 16, %s7, [#allocation5]
    $region37: #{tpu_custom_call.1} parent=1 // pred_fallthru
      _
    // Predicated region
    $region38: #{tpu_custom_call.1} parent=1 // pred_check
      _
    $region39: #{tpu_custom_call.1} parent=1 // pred_check_branch
      %888 = sbr.rel (0) target = $region41
    $region40: #{tpu_custom_call.1} parent=1 // pred_region
      %889 = dma.done [#allocation5], 16
    $region41: #{tpu_custom_call.1} parent=1 // pred_fallthru
      _
    %890 = vsyncpa [#allocation4], 1
    %891 = vsyncpa [#allocation5], 1

</llo_original>
